<compile_context>
chip_gen: v5e
topology: v5e:2x2
jax: 0.10.0
libtpu: 0.0.40
codegen_flags: <defaults>
</compile_context>

<pallas_src>
import functools

import jax
import jax.numpy as jnp
from jax.experimental import pallas as pl
from jax.experimental.pallas import tpu as pltpu


def _round_up(x, m):
    return ((x + m - 1) // m) * m


def _focal_loss_kernel(logits_ref, targets_ref, out_ref, *,
                       gamma, n_valid, tile_n, targets_resident):
    i = pl.program_id(0)

    logits = logits_ref[...].astype(jnp.float32)              # (tile_n, C)
    tn, c = logits.shape

    if targets_resident:
        # Targets resident in VMEM as (padded_n, 1); slice this tile's rows.
        row_start = pl.multiple_of(i * tile_n, tile_n)         # tile_n % 8 == 0 -> aligned
        tgt = targets_ref[pl.ds(row_start, tile_n), :]         # (tile_n, 1) int32
    else:
        tgt = targets_ref[...]                                 # (tile_n, 1) int32

    # cross_entropy(reduction='none'): ce_r = logsumexp(logits_r) - logits_r[target_r]
    row_max = jnp.max(logits, axis=-1, keepdims=True)          # (tile_n, 1)
    lse = row_max + jnp.log(
        jnp.sum(jnp.exp(logits - row_max), axis=-1, keepdims=True))

    class_iota = jax.lax.broadcasted_iota(jnp.int32, (tn, c), 1)
    target_logit = jnp.sum(
        jnp.where(class_iota == tgt, logits, 0.0), axis=-1, keepdims=True)

    # ce is mathematically >= 0; rounding can make it slightly negative, which would give
    # pt > 1 and (1 - pt) < 0 (NaN under a float-exponent pow).  Clamp.
    ce = jnp.maximum(lse - target_logit, 0.0)                  # (tile_n, 1)
    pt = jnp.exp(-ce)
    one_minus_pt = 1.0 - pt

    if float(gamma).is_integer() and gamma >= 0:
        # Integer gamma (e.g. 2.0): cheap VPU multiplies, no EUP pow (log+exp).
        w = jnp.ones_like(one_minus_pt)
        for _ in range(int(gamma)):
            w = w * one_minus_pt
    else:
        w = jnp.power(jnp.maximum(one_minus_pt, 0.0), gamma)

    fl = w * ce                                                # per-sample (alpha folded out)

    # Mask padded rows (N was padded up to a tile multiple).
    row_ids = jax.lax.broadcasted_iota(jnp.int32, (tn, 1), 0) + i * tile_n
    fl = jnp.where(row_ids < n_valid, fl, 0.0)

    # Per-tile partial sum -> this tile's own lane-dense output block.
    partial = jnp.sum(fl)
    out_ref[...] = jnp.broadcast_to(partial, out_ref.shape)


def focal_loss_pallas(outputs, targets, gamma=2.0, alpha=1.0, tile_n=None):
    """outputs: [N, C] float logits (f32 or bf16), targets: [N] int class indices -> scalar f32."""
    n, c = outputs.shape
    itemsize = outputs.dtype.itemsize
    # VMEM footprint per logits row (lanes padded to a multiple of 128).
    padded_row_bytes = _round_up(c, 128) * itemsize

    if tile_n is None:
        # ~4 MiB of (VMEM-laid-out) logits per pipeline buffer, at most 2048 rows; big tiles
        # amortize the ~0.35 us/step pipeline overhead.
        tile_n = min(2048, max(8, (4 << 20) // padded_row_bytes), _round_up(n, 8))
        tile_n = max(8, (tile_n // 8) * 8)
    assert tile_n % 8 == 0

    padded_n = _round_up(n, tile_n)
    num_tiles = padded_n // tile_n

    if padded_n != n:
        outputs = jnp.pad(outputs, ((0, padded_n - n), (0, 0)))
        targets = jnp.pad(targets, (0, padded_n - n))
    targets_2d = targets.astype(jnp.int32).reshape(padded_n, 1)

    # A (rows, 1) int32 column occupies ceil(rows/8) * 4 KiB of VMEM (lane padding to 128).
    resident_tgt_bytes = (padded_n // 8) * 4096
    tiled_tgt_bytes = 2 * (tile_n // 8) * 4096                 # double-buffered fallback

    # Keep the targets resident in VMEM (one DMA, constant block index -> never re-fetched)
    # when the tiled footprint is small; otherwise stream a block per tile.
    targets_resident = resident_tgt_bytes <= (4 << 20)
    if targets_resident:
        tgt_spec = pl.BlockSpec((padded_n, 1), lambda i: (0, 0))
        tgt_vmem = resident_tgt_bytes
    else:
        tgt_spec = pl.BlockSpec((tile_n, 1), lambda i: (i, 0))
        tgt_vmem = tiled_tgt_bytes

    kernel = functools.partial(
        _focal_loss_kernel, gamma=float(gamma),
        n_valid=n, tile_n=tile_n, targets_resident=targets_resident)

    vmem_needed = (2 * tile_n * padded_row_bytes               # logits double buffer
                   + tgt_vmem                                  # targets
                   + 2 * 8 * 128 * 4)                          # output double buffer
    # Raise the scoped-VMEM limit for big tiles; stay comfortably under v7x's 64 MiB.
    vmem_limit = int(min(max(vmem_needed + (4 << 20), 32 << 20), 48 << 20))

    partials = pl.pallas_call(
        kernel,
        out_shape=jax.ShapeDtypeStruct((num_tiles, 8, 128), jnp.float32),
        grid_spec=pltpu.PrefetchScalarGridSpec(
            num_scalar_prefetch=0,
            grid=(num_tiles,),
            in_specs=[
                pl.BlockSpec((tile_n, c), lambda i: (i, 0)),   # logits tile (VMEM)
                tgt_spec,                                      # targets
            ],
            out_specs=pl.BlockSpec((1, 8, 128), lambda i: (i, 0, 0)),
        ),
        compiler_params=pltpu.CompilerParams(
            dimension_semantics=("parallel",),
            vmem_limit_bytes=vmem_limit),
    )(outputs, targets_2d)

    # Final mean: sum of per-tile partials, then one fused alpha/N scale.
    return jnp.sum(partials[:, 0, 0]) * jnp.float32(float(alpha) / n)


def _focal_loss_ref(outputs, targets, gamma=2.0, alpha=1.0):
    logits = outputs.astype(jnp.float32)
    lse = jax.scipy.special.logsumexp(logits, axis=-1)
    target_logit = jnp.take_along_axis(
        logits, targets[:, None].astype(jnp.int32), axis=-1)[:, 0]
    ce = lse - target_logit
    pt = jnp.exp(-ce)
    return jnp.mean(alpha * (1.0 - pt) ** gamma * ce)


if __name__ == "__main__":
    # FocalLoss(gamma=2.0, alpha=1.0) — no learnable parameters.
    N, C = 128, 32
    key = jax.random.PRNGKey(0)
    k_logits, k_targets = jax.random.split(key)
    outputs = jax.random.normal(k_logits, (N, C), dtype=jnp.float32)
    targets = jax.random.randint(k_targets, (N,), 0, C, dtype=jnp.int32)

    loss = jax.block_until_ready(
        focal_loss_pallas(outputs, targets, gamma=2.0, alpha=1.0))
    ref = _focal_loss_ref(outputs, targets, gamma=2.0, alpha=1.0)
    assert jnp.allclose(loss, ref, rtol=1e-5, atol=1e-6), (loss, ref)

    # Tail / multi-tile path: N not a multiple of the tile (exercises padding mask).
    N2 = 100
    outputs2 = jax.random.normal(jax.random.PRNGKey(1), (N2, C), dtype=jnp.float32)
    targets2 = jax.random.randint(jax.random.PRNGKey(2), (N2,), 0, C, dtype=jnp.int32)
    loss2 = jax.block_until_ready(
        focal_loss_pallas(outputs2, targets2, gamma=2.0, alpha=1.0, tile_n=64))
    ref2 = _focal_loss_ref(outputs2, targets2, gamma=2.0, alpha=1.0)
    assert jnp.allclose(loss2, ref2, rtol=1e-5, atol=1e-6), (loss2, ref2)

    # bf16 logits path (halved HBM traffic; math still f32) + non-trivial alpha / non-int gamma.
    outputs3 = outputs.astype(jnp.bfloat16)
    loss3 = jax.block_until_ready(
        focal_loss_pallas(outputs3, targets, gamma=1.5, alpha=0.25))
    ref3 = _focal_loss_ref(outputs3, targets, gamma=1.5, alpha=0.25)
    assert jnp.allclose(loss3, ref3, rtol=1e-5, atol=1e-6), (loss3, ref3)

    print("KERNEL_OK")
</pallas_src>

<mosaic_0001>
module attributes {stable_mosaic.version = 11 : i64} {
  func.func @_focal_loss_kernel(%arg0: i32, %arg1: memref<128x32xf32, #tpu.memory_space<vmem>>, %arg2: memref<128x1xi32, #tpu.memory_space<vmem>>, %arg3: memref<1x8x128xf32, #tpu.memory_space<vmem>>) attributes {dimension_semantics = [#tpu.dimension_semantics<parallel>], iteration_bounds = array<i64: 1>, scalar_prefetch = 0 : i64, scratch_operands = 0 : i64, tpu.core_type = #tpu.core_type<tc>, window_params = [{transform_indices = @transform_0, window_bounds = array<i64: 128, 32>}, {pipeline_mode = #tpu.pipeline_mode<synchronous>, transform_indices = @transform_1, window_bounds = array<i64: 128, 1>}, {transform_indices = @transform_2, window_bounds = array<i64: 1, 8, 128>}]} {
    %c0 = arith.constant 0 : index
    %c0_0 = arith.constant 0 : index
    %0 = vector.load %arg1[%c0, %c0_0] : memref<128x32xf32, #tpu.memory_space<vmem>>, vector<128x32xf32>
    %c128_i32 = arith.constant 128 : i32
    %1 = arith.muli %arg0, %c128_i32 : i32
    %2 = tpu.assume_multiple %1, 128 : i32
    %3 = arith.index_cast %2 : i32 to index
    %c0_1 = arith.constant 0 : index
    %4 = vector.load %arg2[%3, %c0_1] : memref<128x1xi32, #tpu.memory_space<vmem>>, vector<128x1xi32>
    %cst = arith.constant dense<0xFF800000> : vector<128xf32>
    %5 = vector.multi_reduction <maximumf>, %0, %cst [1] : vector<128x32xf32> to vector<128xf32>
    %6 = vector.shape_cast %5 : vector<128xf32> to vector<128x1xf32>
    %7 = vector.broadcast %6 : vector<128x1xf32> to vector<128x32xf32>
    %8 = arith.subf %0, %7 : vector<128x32xf32>
    %9 = math.exp %8 : vector<128x32xf32>
    %cst_2 = arith.constant dense<0.000000e+00> : vector<128xf32>
    %10 = vector.multi_reduction <add>, %9, %cst_2 [1] : vector<128x32xf32> to vector<128xf32>
    %11 = vector.shape_cast %10 : vector<128xf32> to vector<128x1xf32>
    %12 = math.log %11 : vector<128x1xf32>
    %13 = arith.addf %6, %12 : vector<128x1xf32>
    %14 = tpu.iota {dimensions = array<i32: 1>} : vector<128x32xi32>
    %15 = vector.broadcast %4 : vector<128x1xi32> to vector<128x32xi32>
    %16 = arith.cmpi eq, %14, %15 : vector<128x32xi32>
    %cst_3 = arith.constant 0.000000e+00 : f32
    %17 = vector.broadcast %cst_3 : f32 to vector<128x32xf32>
    %18 = arith.select %16, %0, %17 : vector<128x32xi1>, vector<128x32xf32>
    %cst_4 = arith.constant dense<0.000000e+00> : vector<128xf32>
    %19 = vector.multi_reduction <add>, %18, %cst_4 [1] : vector<128x32xf32> to vector<128xf32>
    %20 = vector.shape_cast %19 : vector<128xf32> to vector<128x1xf32>
    %21 = arith.subf %13, %20 : vector<128x1xf32>
    %cst_5 = arith.constant 0.000000e+00 : f32
    %22 = vector.broadcast %cst_5 : f32 to vector<128x1xf32>
    %23 = arith.maximumf %21, %22 : vector<128x1xf32>
    %cst_6 = arith.constant 0.000000e+00 : f32
    %24 = vector.broadcast %cst_6 : f32 to vector<128x1xf32>
    %25 = arith.subf %24, %23 : vector<128x1xf32>
    %26 = math.exp %25 : vector<128x1xf32>
    %cst_7 = arith.constant 1.000000e+00 : f32
    %27 = vector.broadcast %cst_7 : f32 to vector<128x1xf32>
    %28 = arith.subf %27, %26 : vector<128x1xf32>
    %cst_8 = arith.constant 1.000000e+00 : f32
    %29 = vector.broadcast %cst_8 : f32 to vector<128x1xf32>
    %30 = arith.mulf %29, %28 : vector<128x1xf32>
    %31 = arith.mulf %30, %28 : vector<128x1xf32>
    %32 = arith.mulf %31, %23 : vector<128x1xf32>
    %33 = tpu.iota {dimensions = array<i32: 0>} : vector<128x1xi32>
    %c128_i32_9 = arith.constant 128 : i32
    %34 = arith.muli %arg0, %c128_i32_9 : i32
    %35 = vector.broadcast %34 : i32 to vector<128x1xi32>
    %36 = arith.addi %33, %35 : vector<128x1xi32>
    %c128_i32_10 = arith.constant 128 : i32
    %37 = vector.broadcast %c128_i32_10 : i32 to vector<128x1xi32>
    %38 = arith.cmpi slt, %36, %37 : vector<128x1xi32>
    %cst_11 = arith.constant 0.000000e+00 : f32
    %39 = vector.broadcast %cst_11 : f32 to vector<128x1xf32>
    %40 = arith.select %38, %32, %39 : vector<128x1xi1>, vector<128x1xf32>
    %41 = vector.shape_cast %40 : vector<128x1xf32> to vector<1x128x1xf32>
    %cst_12 = arith.constant dense<0.000000e+00> : vector<1xf32>
    %42 = vector.multi_reduction <add>, %41, %cst_12 [1, 2] : vector<1x128x1xf32> to vector<1xf32>
    %43 = vector.shape_cast %42 : vector<1xf32> to vector<1x1x1xf32>
    %44 = vector.extract %43[0, 0, 0] : f32 from vector<1x1x1xf32>
    %45 = vector.broadcast %44 : f32 to vector<1x8x128xf32>
    %c0_13 = arith.constant 0 : index
    %c0_14 = arith.constant 0 : index
    %c0_15 = arith.constant 0 : index
    %46 = vector.load %arg3[%c0_13, %c0_14, %c0_15] : memref<1x8x128xf32, #tpu.memory_space<vmem>>, vector<1x8x128xf32>
    tpu.vector_store %arg3[%c0_13, %c0_14, %c0_15], %45 {strides = array<i32>} : memref<1x8x128xf32, #tpu.memory_space<vmem>>, vector<1x8x128xf32>,
    return
  }
  func.func @transform_0(%arg0: i32) -> (i32, i32) {
    %c0_i32 = arith.constant 0 : i32
    %c0_i32_0 = arith.constant 0 : i32
    return %arg0, %c0_i32 : i32, i32
  }
  func.func @transform_1(%arg0: i32) -> (i32, i32) {
    %c0_i32 = arith.constant 0 : i32
    %c0_i32_0 = arith.constant 0 : i32
    %c0_i32_1 = arith.constant 0 : i32
    return %c0_i32, %c0_i32_0 : i32, i32
  }
  func.func @transform_2(%arg0: i32) -> (i32, i32, i32) {
    %c0_i32 = arith.constant 0 : i32
    %c0_i32_0 = arith.constant 0 : i32
    %c0_i32_1 = arith.constant 0 : i32
    return %arg0, %c0_i32, %c0_i32_0 : i32, i32, i32
  }
}

</mosaic_0001>

<llo_original>
// kernel: tpu_custom_call.1
$region0: #{tpu_custom_call.1}
  #allocation0 [shape = 'u32[]', space=smem, size = 0x4, offset = 0x4, fixed_abs, tag = 'smem constant byte address 0x4 - core index']
  #allocation1 [shape = 'u32[72,128]{1,0:T(1,128)}', space=vmem, size = 0x9000, scoped, tag = 'internal scratch']
  %s0 = inlined_call_operand.vmem [shape: f32[128,32], index: 0, kind: input, shape index: {}]
  %s1 = inlined_call_operand.vmem [shape: s32[128,1], index: 1, kind: input, shape index: {}]
  %s2 = inlined_call_operand.hbm [shape: f32[1,8,128], index: 2, kind: output, shape index: {}]
  %s3 = sld [smem:[#allocation0]]
  $region18: #{tpu_custom_call.1} parent=0
    _
  %s5 = ssub.s32 1, %s3
  %s6 = scalar_select 0, %s5, %s3
  $region1: #{tpu_custom_call.1} parent=0
    #allocation2 [shape = 'u8[4096]{0}', space=vmem, size = 0x1000, scoped, tag = 'output window, operand 0, single buffered']
    #allocation3 [shape = 's32[1]{0}', space=sflag, size = 0x4, scoped, tag = 'scoped memory for tpu_custom_call.1']
    %7 = vsyncpa [#allocation3], 0
    // Predicated region
    $region2: #{tpu_custom_call.1} parent=1 // pred_check
      _
    $region3: #{tpu_custom_call.1} parent=1 // pred_check_branch
      %9 = sbr.rel (0) target = $region5
    $region4: #{tpu_custom_call.1} parent=1 // pred_region
      _
    $region5: #{tpu_custom_call.1} parent=1 // pred_fallthru
      _
    // Predicated region
    $region6: #{tpu_custom_call.1} parent=1 // pred_check
      _
    $region7: #{tpu_custom_call.1} parent=1 // pred_check_branch
      %11 = sbr.rel (0) target = $region9
    $region8: #{tpu_custom_call.1} parent=1 // pred_region
      _
    $region9: #{tpu_custom_call.1} parent=1 // pred_fallthru
      _
    %v12 = vld [vmem:[%s0] sm:$0xff]
    %v13 = vld [vmem:[%s0 + $0x8] sm:$0xff]
    %v14 = vld [vmem:[%s0 + $0x10] sm:$0xff]
    %v15 = vld [vmem:[%s0 + $0x18] sm:$0xff]
    %v16 = vld [vmem:[%s0 + $0x20] sm:$0xff]
    %v17 = vld [vmem:[%s0 + $0x28] sm:$0xff]
    %v18 = vld [vmem:[%s0 + $0x30] sm:$0xff]
    %v19 = vld [vmem:[%s0 + $0x38] sm:$0xff]
    %v20 = vld [vmem:[%s0 + $0x40] sm:$0xff]
    %v21 = vld [vmem:[%s0 + $0x48] sm:$0xff]
    %v22 = vld [vmem:[%s0 + $0x50] sm:$0xff]
    %v23 = vld [vmem:[%s0 + $0x58] sm:$0xff]
    %v24 = vld [vmem:[%s0 + $0x60] sm:$0xff]
    %v25 = vld [vmem:[%s0 + $0x68] sm:$0xff]
    %v26 = vld [vmem:[%s0 + $0x70] sm:$0xff]
    %v27 = vld [vmem:[%s0 + $0x78] sm:$0xff]
    %s28 = smul.u32 0, 128
    %s29 = scalar_lea.vmem %s1, %s28
    %v30 = vld [vmem:[%s29] sm:$0xff]
    %v31 = vld [vmem:[%s29 + $0x8] sm:$0xff]
    %v32 = vld [vmem:[%s29 + $0x10] sm:$0xff]
    %v33 = vld [vmem:[%s29 + $0x18] sm:$0xff]
    %v34 = vld [vmem:[%s29 + $0x20] sm:$0xff]
    %v35 = vld [vmem:[%s29 + $0x28] sm:$0xff]
    %v36 = vld [vmem:[%s29 + $0x30] sm:$0xff]
    %v37 = vld [vmem:[%s29 + $0x38] sm:$0xff]
    %v38 = vld [vmem:[%s29 + $0x40] sm:$0xff]
    %v39 = vld [vmem:[%s29 + $0x48] sm:$0xff]
    %v40 = vld [vmem:[%s29 + $0x50] sm:$0xff]
    %v41 = vld [vmem:[%s29 + $0x58] sm:$0xff]
    %v42 = vld [vmem:[%s29 + $0x60] sm:$0xff]
    %v43 = vld [vmem:[%s29 + $0x68] sm:$0xff]
    %v44 = vld [vmem:[%s29 + $0x70] sm:$0xff]
    %v45 = vld [vmem:[%s29 + $0x78] sm:$0xff]
    %vm46 = vcmask 261120
    %v47 = vsel %vm46, %v12, -inf
    %48 = vmax.xlane.f32.xlu0 %v47
    %v49 = vpop.xlane.xlu0 %48
    %v50 = vsel %vm46, %v13, -inf
    %51 = vmax.xlane.f32.xlu0 %v50
    %v52 = vpop.xlane.xlu0 %51
    %v53 = vsel %vm46, %v14, -inf
    %54 = vmax.xlane.f32.xlu0 %v53
    %v55 = vpop.xlane.xlu0 %54
    %v56 = vsel %vm46, %v15, -inf
    %57 = vmax.xlane.f32.xlu0 %v56
    %v58 = vpop.xlane.xlu0 %57
    %v59 = vsel %vm46, %v16, -inf
    %60 = vmax.xlane.f32.xlu0 %v59
    %v61 = vpop.xlane.xlu0 %60
    %v62 = vsel %vm46, %v17, -inf
    %63 = vmax.xlane.f32.xlu0 %v62
    %v64 = vpop.xlane.xlu0 %63
    %v65 = vsel %vm46, %v18, -inf
    %66 = vmax.xlane.f32.xlu0 %v65
    %v67 = vpop.xlane.xlu0 %66
    %v68 = vsel %vm46, %v19, -inf
    %69 = vmax.xlane.f32.xlu0 %v68
    %v70 = vpop.xlane.xlu0 %69
    %v71 = vsel %vm46, %v20, -inf
    %72 = vmax.xlane.f32.xlu0 %v71
    %v73 = vpop.xlane.xlu0 %72
    %v74 = vsel %vm46, %v21, -inf
    %75 = vmax.xlane.f32.xlu0 %v74
    %v76 = vpop.xlane.xlu0 %75
    %v77 = vsel %vm46, %v22, -inf
    %78 = vmax.xlane.f32.xlu0 %v77
    %v79 = vpop.xlane.xlu0 %78
    %v80 = vsel %vm46, %v23, -inf
    %81 = vmax.xlane.f32.xlu0 %v80
    %v82 = vpop.xlane.xlu0 %81
    %v83 = vsel %vm46, %v24, -inf
    %84 = vmax.xlane.f32.xlu0 %v83
    %v85 = vpop.xlane.xlu0 %84
    %v86 = vsel %vm46, %v25, -inf
    %87 = vmax.xlane.f32.xlu0 %v86
    %v88 = vpop.xlane.xlu0 %87
    %v89 = vsel %vm46, %v26, -inf
    %90 = vmax.xlane.f32.xlu0 %v89
    %v91 = vpop.xlane.xlu0 %90
    %v92 = vsel %vm46, %v27, -inf
    %93 = vmax.xlane.f32.xlu0 %v92
    %v94 = vpop.xlane.xlu0 %93
    %v95 = vsub.f32 %v12, %v49
    %v96 = vsub.f32 %v13, %v52
    %v97 = vsub.f32 %v14, %v55
    %v98 = vsub.f32 %v15, %v58
    %v99 = vsub.f32 %v16, %v61
    %v100 = vsub.f32 %v17, %v64
    %v101 = vsub.f32 %v18, %v67
    %v102 = vsub.f32 %v19, %v70
    %v103 = vsub.f32 %v20, %v73
    %v104 = vsub.f32 %v21, %v76
    %v105 = vsub.f32 %v22, %v79
    %v106 = vsub.f32 %v23, %v82
    %v107 = vsub.f32 %v24, %v85
    %v108 = vsub.f32 %v25, %v88
    %v109 = vsub.f32 %v26, %v91
    %v110 = vsub.f32 %v27, %v94
    %v111 = vmul.f32 %v95, 1.442695
    %v112 = vpow.pop %v111
    %v113 = vmul.f32 %v96, 1.442695
    %v114 = vpow.pop %v113
    %v115 = vmul.f32 %v97, 1.442695
    %v116 = vpow.pop %v115
    %v117 = vmul.f32 %v98, 1.442695
    %v118 = vpow.pop %v117
    %v119 = vmul.f32 %v99, 1.442695
    %v120 = vpow.pop %v119
    %v121 = vmul.f32 %v100, 1.442695
    %v122 = vpow.pop %v121
    %v123 = vmul.f32 %v101, 1.442695
    %v124 = vpow.pop %v123
    %v125 = vmul.f32 %v102, 1.442695
    %v126 = vpow.pop %v125
    %v127 = vmul.f32 %v103, 1.442695
    %v128 = vpow.pop %v127
    %v129 = vmul.f32 %v104, 1.442695
    %v130 = vpow.pop %v129
    %v131 = vmul.f32 %v105, 1.442695
    %v132 = vpow.pop %v131
    %v133 = vmul.f32 %v106, 1.442695
    %v134 = vpow.pop %v133
    %v135 = vmul.f32 %v107, 1.442695
    %v136 = vpow.pop %v135
    %v137 = vmul.f32 %v108, 1.442695
    %v138 = vpow.pop %v137
    %v139 = vmul.f32 %v109, 1.442695
    %v140 = vpow.pop %v139
    %v141 = vmul.f32 %v110, 1.442695
    %v142 = vpow.pop %v141
    %v143 = vsel %vm46, %v112, 0.0
    %144 = vadd.xlane.f32.xlu0 %v143
    %v145 = vpop.xlane.xlu0 %144
    %v146 = vsel %vm46, %v114, 0.0
    %147 = vadd.xlane.f32.xlu0 %v146
    %v148 = vpop.xlane.xlu0 %147
    %v149 = vsel %vm46, %v116, 0.0
    %150 = vadd.xlane.f32.xlu0 %v149
    %v151 = vpop.xlane.xlu0 %150
    %v152 = vsel %vm46, %v118, 0.0
    %153 = vadd.xlane.f32.xlu0 %v152
    %v154 = vpop.xlane.xlu0 %153
    %v155 = vsel %vm46, %v120, 0.0
    %156 = vadd.xlane.f32.xlu0 %v155
    %v157 = vpop.xlane.xlu0 %156
    %v158 = vsel %vm46, %v122, 0.0
    %159 = vadd.xlane.f32.xlu0 %v158
    %v160 = vpop.xlane.xlu0 %159
    %v161 = vsel %vm46, %v124, 0.0
    %162 = vadd.xlane.f32.xlu0 %v161
    %v163 = vpop.xlane.xlu0 %162
    %v164 = vsel %vm46, %v126, 0.0
    %165 = vadd.xlane.f32.xlu0 %v164
    %v166 = vpop.xlane.xlu0 %165
    %v167 = vsel %vm46, %v128, 0.0
    %168 = vadd.xlane.f32.xlu0 %v167
    %v169 = vpop.xlane.xlu0 %168
    %v170 = vsel %vm46, %v130, 0.0
    %171 = vadd.xlane.f32.xlu0 %v170
    %v172 = vpop.xlane.xlu0 %171
    %v173 = vsel %vm46, %v132, 0.0
    %174 = vadd.xlane.f32.xlu0 %v173
    %v175 = vpop.xlane.xlu0 %174
    %v176 = vsel %vm46, %v134, 0.0
    %177 = vadd.xlane.f32.xlu0 %v176
    %v178 = vpop.xlane.xlu0 %177
    %v179 = vsel %vm46, %v136, 0.0
    %180 = vadd.xlane.f32.xlu0 %v179
    %v181 = vpop.xlane.xlu0 %180
    %v182 = vsel %vm46, %v138, 0.0
    %183 = vadd.xlane.f32.xlu0 %v182
    %v184 = vpop.xlane.xlu0 %183
    %v185 = vsel %vm46, %v140, 0.0
    %186 = vadd.xlane.f32.xlu0 %v185
    %v187 = vpop.xlane.xlu0 %186
    %v188 = vsel %vm46, %v142, 0.0
    %189 = vadd.xlane.f32.xlu0 %v188
    %v190 = vpop.xlane.xlu0 %189
    %v191 = vlog2.pop %v145
    %v192 = vmul.f32 %v191, 0.6931472
    %v193 = vlog2.pop %v148
    %v194 = vmul.f32 %v193, 0.6931472
    %v195 = vlog2.pop %v151
    %v196 = vmul.f32 %v195, 0.6931472
    %v197 = vlog2.pop %v154
    %v198 = vmul.f32 %v197, 0.6931472
    %v199 = vlog2.pop %v157
    %v200 = vmul.f32 %v199, 0.6931472
    %v201 = vlog2.pop %v160
    %v202 = vmul.f32 %v201, 0.6931472
    %v203 = vlog2.pop %v163
    %v204 = vmul.f32 %v203, 0.6931472
    %v205 = vlog2.pop %v166
    %v206 = vmul.f32 %v205, 0.6931472
    %v207 = vlog2.pop %v169
    %v208 = vmul.f32 %v207, 0.6931472
    %v209 = vlog2.pop %v172
    %v210 = vmul.f32 %v209, 0.6931472
    %v211 = vlog2.pop %v175
    %v212 = vmul.f32 %v211, 0.6931472
    %v213 = vlog2.pop %v178
    %v214 = vmul.f32 %v213, 0.6931472
    %v215 = vlog2.pop %v181
    %v216 = vmul.f32 %v215, 0.6931472
    %v217 = vlog2.pop %v184
    %v218 = vmul.f32 %v217, 0.6931472
    %v219 = vlog2.pop %v187
    %v220 = vmul.f32 %v219, 0.6931472
    %v221 = vlog2.pop %v190
    %v222 = vmul.f32 %v221, 0.6931472
    %v223 = vadd.f32 %v49, %v192
    %v224 = vadd.f32 %v52, %v194
    %v225 = vadd.f32 %v55, %v196
    %v226 = vadd.f32 %v58, %v198
    %v227 = vadd.f32 %v61, %v200
    %v228 = vadd.f32 %v64, %v202
    %v229 = vadd.f32 %v67, %v204
    %v230 = vadd.f32 %v70, %v206
    %v231 = vadd.f32 %v73, %v208
    %v232 = vadd.f32 %v76, %v210
    %v233 = vadd.f32 %v79, %v212
    %v234 = vadd.f32 %v82, %v214
    %v235 = vadd.f32 %v85, %v216
    %v236 = vadd.f32 %v88, %v218
    %v237 = vadd.f32 %v91, %v220
    %v238 = vadd.f32 %v94, %v222
    %v239 = vlaneseq
    %v240 = vand.u32 %v239, 127
    %241 = vset.pattern.permute.xlu0 0
    %242 = vperm.xlu0 %241, %v30
    %v243 = vpop.permute.xlu0 %242
    %244 = vset.pattern.permute.xlu0 0
    %245 = vperm.xlu0 %244, %v31
    %v246 = vpop.permute.xlu0 %245
    %247 = vset.pattern.permute.xlu0 0
    %248 = vperm.xlu0 %247, %v32
    %v249 = vpop.permute.xlu0 %248
    %250 = vset.pattern.permute.xlu0 0
    %251 = vperm.xlu0 %250, %v33
    %v252 = vpop.permute.xlu0 %251
    %253 = vset.pattern.permute.xlu0 0
    %254 = vperm.xlu0 %253, %v34
    %v255 = vpop.permute.xlu0 %254
    %256 = vset.pattern.permute.xlu0 0
    %257 = vperm.xlu0 %256, %v35
    %v258 = vpop.permute.xlu0 %257
    %259 = vset.pattern.permute.xlu0 0
    %260 = vperm.xlu0 %259, %v36
    %v261 = vpop.permute.xlu0 %260
    %262 = vset.pattern.permute.xlu0 0
    %263 = vperm.xlu0 %262, %v37
    %v264 = vpop.permute.xlu0 %263
    %265 = vset.pattern.permute.xlu0 0
    %266 = vperm.xlu0 %265, %v38
    %v267 = vpop.permute.xlu0 %266
    %268 = vset.pattern.permute.xlu0 0
    %269 = vperm.xlu0 %268, %v39
    %v270 = vpop.permute.xlu0 %269
    %271 = vset.pattern.permute.xlu0 0
    %272 = vperm.xlu0 %271, %v40
    %v273 = vpop.permute.xlu0 %272
    %274 = vset.pattern.permute.xlu0 0
    %275 = vperm.xlu0 %274, %v41
    %v276 = vpop.permute.xlu0 %275
    %277 = vset.pattern.permute.xlu0 0
    %278 = vperm.xlu0 %277, %v42
    %v279 = vpop.permute.xlu0 %278
    %280 = vset.pattern.permute.xlu0 0
    %281 = vperm.xlu0 %280, %v43
    %v282 = vpop.permute.xlu0 %281
    %283 = vset.pattern.permute.xlu0 0
    %284 = vperm.xlu0 %283, %v44
    %v285 = vpop.permute.xlu0 %284
    %286 = vset.pattern.permute.xlu0 0
    %287 = vperm.xlu0 %286, %v45
    %v288 = vpop.permute.xlu0 %287
    %vm289 = vcmp.eq.s32.totalorder %v240, %v243
    %vm290 = vcmp.eq.s32.totalorder %v240, %v246
    %vm291 = vcmp.eq.s32.totalorder %v240, %v249
    %vm292 = vcmp.eq.s32.totalorder %v240, %v252
    %vm293 = vcmp.eq.s32.totalorder %v240, %v255
    %vm294 = vcmp.eq.s32.totalorder %v240, %v258
    %vm295 = vcmp.eq.s32.totalorder %v240, %v261
    %vm296 = vcmp.eq.s32.totalorder %v240, %v264
    %vm297 = vcmp.eq.s32.totalorder %v240, %v267
    %vm298 = vcmp.eq.s32.totalorder %v240, %v270
    %vm299 = vcmp.eq.s32.totalorder %v240, %v273
    %vm300 = vcmp.eq.s32.totalorder %v240, %v276
    %vm301 = vcmp.eq.s32.totalorder %v240, %v279
    %vm302 = vcmp.eq.s32.totalorder %v240, %v282
    %vm303 = vcmp.eq.s32.totalorder %v240, %v285
    %vm304 = vcmp.eq.s32.totalorder %v240, %v288
    %v305 = vsel %vm289, %v12, 0.0
    %v306 = vsel %vm290, %v13, 0.0
    %v307 = vsel %vm291, %v14, 0.0
    %v308 = vsel %vm292, %v15, 0.0
    %v309 = vsel %vm293, %v16, 0.0
    %v310 = vsel %vm294, %v17, 0.0
    %v311 = vsel %vm295, %v18, 0.0
    %v312 = vsel %vm296, %v19, 0.0
    %v313 = vsel %vm297, %v20, 0.0
    %v314 = vsel %vm298, %v21, 0.0
    %v315 = vsel %vm299, %v22, 0.0
    %v316 = vsel %vm300, %v23, 0.0
    %v317 = vsel %vm301, %v24, 0.0
    %v318 = vsel %vm302, %v25, 0.0
    %v319 = vsel %vm303, %v26, 0.0
    %v320 = vsel %vm304, %v27, 0.0
    %v321 = vsel %vm46, %v305, 0.0
    %322 = vadd.xlane.f32.xlu0 %v321
    %v323 = vpop.xlane.xlu0 %322
    %v324 = vsel %vm46, %v306, 0.0
    %325 = vadd.xlane.f32.xlu0 %v324
    %v326 = vpop.xlane.xlu0 %325
    %v327 = vsel %vm46, %v307, 0.0
    %328 = vadd.xlane.f32.xlu0 %v327
    %v329 = vpop.xlane.xlu0 %328
    %v330 = vsel %vm46, %v308, 0.0
    %331 = vadd.xlane.f32.xlu0 %v330
    %v332 = vpop.xlane.xlu0 %331
    %v333 = vsel %vm46, %v309, 0.0
    %334 = vadd.xlane.f32.xlu0 %v333
    %v335 = vpop.xlane.xlu0 %334
    %v336 = vsel %vm46, %v310, 0.0
    %337 = vadd.xlane.f32.xlu0 %v336
    %v338 = vpop.xlane.xlu0 %337
    %v339 = vsel %vm46, %v311, 0.0
    %340 = vadd.xlane.f32.xlu0 %v339
    %v341 = vpop.xlane.xlu0 %340
    %v342 = vsel %vm46, %v312, 0.0
    %343 = vadd.xlane.f32.xlu0 %v342
    %v344 = vpop.xlane.xlu0 %343
    %v345 = vsel %vm46, %v313, 0.0
    %346 = vadd.xlane.f32.xlu0 %v345
    %v347 = vpop.xlane.xlu0 %346
    %v348 = vsel %vm46, %v314, 0.0
    %349 = vadd.xlane.f32.xlu0 %v348
    %v350 = vpop.xlane.xlu0 %349
    %v351 = vsel %vm46, %v315, 0.0
    %352 = vadd.xlane.f32.xlu0 %v351
    %v353 = vpop.xlane.xlu0 %352
    %v354 = vsel %vm46, %v316, 0.0
    %355 = vadd.xlane.f32.xlu0 %v354
    %v356 = vpop.xlane.xlu0 %355
    %v357 = vsel %vm46, %v317, 0.0
    %358 = vadd.xlane.f32.xlu0 %v357
    %v359 = vpop.xlane.xlu0 %358
    %v360 = vsel %vm46, %v318, 0.0
    %361 = vadd.xlane.f32.xlu0 %v360
    %v362 = vpop.xlane.xlu0 %361
    %v363 = vsel %vm46, %v319, 0.0
    %364 = vadd.xlane.f32.xlu0 %v363
    %v365 = vpop.xlane.xlu0 %364
    %v366 = vsel %vm46, %v320, 0.0
    %367 = vadd.xlane.f32.xlu0 %v366
    %v368 = vpop.xlane.xlu0 %367
    %v369 = vsub.f32 %v223, %v323
    %v370 = vsub.f32 %v224, %v326
    %v371 = vsub.f32 %v225, %v329
    %v372 = vsub.f32 %v226, %v332
    %v373 = vsub.f32 %v227, %v335
    %v374 = vsub.f32 %v228, %v338
    %v375 = vsub.f32 %v229, %v341
    %v376 = vsub.f32 %v230, %v344
    %v377 = vsub.f32 %v231, %v347
    %v378 = vsub.f32 %v232, %v350
    %v379 = vsub.f32 %v233, %v353
    %v380 = vsub.f32 %v234, %v356
    %v381 = vsub.f32 %v235, %v359
    %v382 = vsub.f32 %v236, %v362
    %v383 = vsub.f32 %v237, %v365
    %v384 = vsub.f32 %v238, %v368
    %v385 = vmax.f32 %v369, 0.0
    %v386 = vmax.f32 %v370, 0.0
    %v387 = vmax.f32 %v371, 0.0
    %v388 = vmax.f32 %v372, 0.0
    %v389 = vmax.f32 %v373, 0.0
    %v390 = vmax.f32 %v374, 0.0
    %v391 = vmax.f32 %v375, 0.0
    %v392 = vmax.f32 %v376, 0.0
    %v393 = vmax.f32 %v377, 0.0
    %v394 = vmax.f32 %v378, 0.0
    %v395 = vmax.f32 %v379, 0.0
    %v396 = vmax.f32 %v380, 0.0
    %v397 = vmax.f32 %v381, 0.0
    %v398 = vmax.f32 %v382, 0.0
    %v399 = vmax.f32 %v383, 0.0
    %v400 = vmax.f32 %v384, 0.0
    %v401 = vsub.f32 0.0, %v385
    %v402 = vsub.f32 0.0, %v386
    %v403 = vsub.f32 0.0, %v387
    %v404 = vsub.f32 0.0, %v388
    %v405 = vsub.f32 0.0, %v389
    %v406 = vsub.f32 0.0, %v390
    %v407 = vsub.f32 0.0, %v391
    %v408 = vsub.f32 0.0, %v392
    %v409 = vsub.f32 0.0, %v393
    %v410 = vsub.f32 0.0, %v394
    %v411 = vsub.f32 0.0, %v395
    %v412 = vsub.f32 0.0, %v396
    %v413 = vsub.f32 0.0, %v397
    %v414 = vsub.f32 0.0, %v398
    %v415 = vsub.f32 0.0, %v399
    %v416 = vsub.f32 0.0, %v400
    %v417 = vmul.f32 %v401, 1.442695
    %v418 = vpow.pop %v417
    %v419 = vmul.f32 %v402, 1.442695
    %v420 = vpow.pop %v419
    %v421 = vmul.f32 %v403, 1.442695
    %v422 = vpow.pop %v421
    %v423 = vmul.f32 %v404, 1.442695
    %v424 = vpow.pop %v423
    %v425 = vmul.f32 %v405, 1.442695
    %v426 = vpow.pop %v425
    %v427 = vmul.f32 %v406, 1.442695
    %v428 = vpow.pop %v427
    %v429 = vmul.f32 %v407, 1.442695
    %v430 = vpow.pop %v429
    %v431 = vmul.f32 %v408, 1.442695
    %v432 = vpow.pop %v431
    %v433 = vmul.f32 %v409, 1.442695
    %v434 = vpow.pop %v433
    %v435 = vmul.f32 %v410, 1.442695
    %v436 = vpow.pop %v435
    %v437 = vmul.f32 %v411, 1.442695
    %v438 = vpow.pop %v437
    %v439 = vmul.f32 %v412, 1.442695
    %v440 = vpow.pop %v439
    %v441 = vmul.f32 %v413, 1.442695
    %v442 = vpow.pop %v441
    %v443 = vmul.f32 %v414, 1.442695
    %v444 = vpow.pop %v443
    %v445 = vmul.f32 %v415, 1.442695
    %v446 = vpow.pop %v445
    %v447 = vmul.f32 %v416, 1.442695
    %v448 = vpow.pop %v447
    %v449 = vsub.f32 1.0, %v418
    %v450 = vsub.f32 1.0, %v420
    %v451 = vsub.f32 1.0, %v422
    %v452 = vsub.f32 1.0, %v424
    %v453 = vsub.f32 1.0, %v426
    %v454 = vsub.f32 1.0, %v428
    %v455 = vsub.f32 1.0, %v430
    %v456 = vsub.f32 1.0, %v432
    %v457 = vsub.f32 1.0, %v434
    %v458 = vsub.f32 1.0, %v436
    %v459 = vsub.f32 1.0, %v438
    %v460 = vsub.f32 1.0, %v440
    %v461 = vsub.f32 1.0, %v442
    %v462 = vsub.f32 1.0, %v444
    %v463 = vsub.f32 1.0, %v446
    %v464 = vsub.f32 1.0, %v448
    %v465 = vmul.f32 %v449, %v449
    %v466 = vmul.f32 %v450, %v450
    %v467 = vmul.f32 %v451, %v451
    %v468 = vmul.f32 %v452, %v452
    %v469 = vmul.f32 %v453, %v453
    %v470 = vmul.f32 %v454, %v454
    %v471 = vmul.f32 %v455, %v455
    %v472 = vmul.f32 %v456, %v456
    %v473 = vmul.f32 %v457, %v457
    %v474 = vmul.f32 %v458, %v458
    %v475 = vmul.f32 %v459, %v459
    %v476 = vmul.f32 %v460, %v460
    %v477 = vmul.f32 %v461, %v461
    %v478 = vmul.f32 %v462, %v462
    %v479 = vmul.f32 %v463, %v463
    %v480 = vmul.f32 %v464, %v464
    %v481 = vmul.f32 %v465, %v385
    %v482 = vmul.f32 %v466, %v386
    %v483 = vmul.f32 %v467, %v387
    %v484 = vmul.f32 %v468, %v388
    %v485 = vmul.f32 %v469, %v389
    %v486 = vmul.f32 %v470, %v390
    %v487 = vmul.f32 %v471, %v391
    %v488 = vmul.f32 %v472, %v392
    %v489 = vmul.f32 %v473, %v393
    %v490 = vmul.f32 %v474, %v394
    %v491 = vmul.f32 %v475, %v395
    %v492 = vmul.f32 %v476, %v396
    %v493 = vmul.f32 %v477, %v397
    %v494 = vmul.f32 %v478, %v398
    %v495 = vmul.f32 %v479, %v399
    %v496 = vmul.f32 %v480, %v400
    %v497 = vlaneseq
    %v498 = vshrl.u32 %v497, 7
    %v499 = vadd.s32 %v498, 8
    %v500 = vadd.s32 %v498, 16
    %v501 = vadd.s32 %v498, 24
    %v502 = vadd.s32 %v498, 32
    %v503 = vadd.s32 %v498, 40
    %v504 = vadd.s32 %v498, 48
    %v505 = vadd.s32 %v498, 56
    %v506 = vadd.s32 %v498, 64
    %v507 = vadd.s32 %v498, 72
    %v508 = vadd.s32 %v498, 80
    %v509 = vadd.s32 %v498, 88
    %v510 = vadd.s32 %v498, 96
    %v511 = vadd.s32 %v498, 104
    %v512 = vadd.s32 %v498, 112
    %v513 = vadd.s32 %v498, 120
    %v514 = vstv %s28
    %v515 = vadd.s32 %v498, %v514
    %v516 = vadd.s32 %v499, %v514
    %v517 = vadd.s32 %v500, %v514
    %v518 = vadd.s32 %v501, %v514
    %v519 = vadd.s32 %v502, %v514
    %v520 = vadd.s32 %v503, %v514
    %v521 = vadd.s32 %v504, %v514
    %v522 = vadd.s32 %v505, %v514
    %v523 = vadd.s32 %v506, %v514
    %v524 = vadd.s32 %v507, %v514
    %v525 = vadd.s32 %v508, %v514
    %v526 = vadd.s32 %v509, %v514
    %v527 = vadd.s32 %v510, %v514
    %v528 = vadd.s32 %v511, %v514
    %v529 = vadd.s32 %v512, %v514
    %v530 = vadd.s32 %v513, %v514
    %vm531 = vcmp.lt.s32.totalorder %v515, 128
    %vm532 = vcmp.lt.s32.totalorder %v516, 128
    %vm533 = vcmp.lt.s32.totalorder %v517, 128
    %vm534 = vcmp.lt.s32.totalorder %v518, 128
    %vm535 = vcmp.lt.s32.totalorder %v519, 128
    %vm536 = vcmp.lt.s32.totalorder %v520, 128
    %vm537 = vcmp.lt.s32.totalorder %v521, 128
    %vm538 = vcmp.lt.s32.totalorder %v522, 128
    %vm539 = vcmp.lt.s32.totalorder %v523, 128
    %vm540 = vcmp.lt.s32.totalorder %v524, 128
    %vm541 = vcmp.lt.s32.totalorder %v525, 128
    %vm542 = vcmp.lt.s32.totalorder %v526, 128
    %vm543 = vcmp.lt.s32.totalorder %v527, 128
    %vm544 = vcmp.lt.s32.totalorder %v528, 128
    %vm545 = vcmp.lt.s32.totalorder %v529, 128
    %vm546 = vcmp.lt.s32.totalorder %v530, 128
    %v547 = vsel %vm531, %v481, 0.0
    %v548 = vsel %vm532, %v482, 0.0
    %v549 = vsel %vm533, %v483, 0.0
    %v550 = vsel %vm534, %v484, 0.0
    %v551 = vsel %vm535, %v485, 0.0
    %v552 = vsel %vm536, %v486, 0.0
    %v553 = vsel %vm537, %v487, 0.0
    %v554 = vsel %vm538, %v488, 0.0
    %v555 = vsel %vm539, %v489, 0.0
    %v556 = vsel %vm540, %v490, 0.0
    %v557 = vsel %vm541, %v491, 0.0
    %v558 = vsel %vm542, %v492, 0.0
    %v559 = vsel %vm543, %v493, 0.0
    %v560 = vsel %vm544, %v494, 0.0
    %v561 = vsel %vm545, %v495, 0.0
    %v562 = vsel %vm546, %v496, 0.0
    %vm563 = vcmask 7168
    %v564 = vsel %vm563, %v547, 0.0
    %v565 = vsel %vm563, %v548, 0.0
    %v566 = vadd.f32 %v564, %v565
    %v567 = vsel %vm563, %v549, 0.0
    %v568 = vadd.f32 %v566, %v567
    %v569 = vsel %vm563, %v550, 0.0
    %v570 = vadd.f32 %v568, %v569
    %v571 = vsel %vm563, %v551, 0.0
    %v572 = vadd.f32 %v570, %v571
    %v573 = vsel %vm563, %v552, 0.0
    %v574 = vadd.f32 %v572, %v573
    %v575 = vsel %vm563, %v553, 0.0
    %v576 = vadd.f32 %v574, %v575
    %v577 = vsel %vm563, %v554, 0.0
    %v578 = vadd.f32 %v576, %v577
    %v579 = vsel %vm563, %v555, 0.0
    %v580 = vadd.f32 %v578, %v579
    %v581 = vsel %vm563, %v556, 0.0
    %v582 = vadd.f32 %v580, %v581
    %v583 = vsel %vm563, %v557, 0.0
    %v584 = vadd.f32 %v582, %v583
    %v585 = vsel %vm563, %v558, 0.0
    %v586 = vadd.f32 %v584, %v585
    %v587 = vsel %vm563, %v559, 0.0
    %v588 = vadd.f32 %v586, %v587
    %v589 = vsel %vm563, %v560, 0.0
    %v590 = vadd.f32 %v588, %v589
    %v591 = vsel %vm563, %v561, 0.0
    %v592 = vadd.f32 %v590, %v591
    %v593 = vsel %vm563, %v562, 0.0
    %v594 = vadd.f32 %v592, %v593
    %595 = vadd.xlane.f32.xlu0 %v594
    %v596 = vpop.xlane.xlu0 %595
    %v597 = vrot.slane %v596, 4
    %v598 = vadd.f32 %v596, %v597
    %v599 = vrot.slane %v598, 2
    %v600 = vadd.f32 %v598, %v599
    %v601 = vrot.slane %v600, 1
    %v602 = vadd.f32 %v600, %v601
    %s603 = vtos %v602
    %v604 = vstv %s603
    %605 = vst [vmem:[#allocation2] sm:$0xff] %v604
    // Predicated region
    $region10: #{tpu_custom_call.1} parent=1 // pred_check
      _
    $region11: #{tpu_custom_call.1} parent=1 // pred_check_branch
      %607 = sbr.rel (0) target = $region13
    $region12: #{tpu_custom_call.1} parent=1 // pred_region
      %609 = vsyncadd [#allocation3], 0
      %s611 = sshll.u32 [#allocation2], 4
      %s612 = int_to_ptr.vmem [resolvable:$true] %s611
      %s613 = sshll.u32 %s2, 4
      %s614 = int_to_ptr.hbm [resolvable:$true] %s613
      %616 = dma.vmem_to_hbm [thread:$0]  %s612, 128, %s614, [#allocation3]
    $region13: #{tpu_custom_call.1} parent=1 // pred_fallthru
      _
    // Predicated region
    $region14: #{tpu_custom_call.1} parent=1 // pred_check
      _
    $region15: #{tpu_custom_call.1} parent=1 // pred_check_branch
      %618 = sbr.rel (0) target = $region17
    $region16: #{tpu_custom_call.1} parent=1 // pred_region
      %620 = dma.done [#allocation3], 128
    $region17: #{tpu_custom_call.1} parent=1 // pred_fallthru
      _
    %621 = vsyncpa [#allocation3], 1

</llo_original>
